<compile_context>
chip_gen: v6e
topology: v6e:2x2x1
jax: 0.10.0
libtpu: 0.0.40
codegen_flags: <defaults>
</compile_context>

<pallas_src>
import jax
import jax.numpy as jnp
import numpy as np
from jax.experimental import pallas as pl
from jax.experimental.pallas import tpu as pltpu


def simple_cnn_kernel(x_ref, we_ref, wo_ref, cb_ref, fw_ref, fb_ref, out_ref):
    # x_ref : (TB, H)      raw input rows (un-padded)
    # we_ref: (H, HCp)     im2col conv weights for even conv rows (pool slot 0)
    # wo_ref: (H, HCp)     im2col conv weights for odd  conv rows (pool slot 1)
    # cb_ref: (1, HCp)     conv bias tiled to pooled layout (column = h*C + c)
    # fw_ref: (HCp, Np)    fc weight, rows permuted to pooled layout, lane-padded
    # fb_ref: (1, Np)      fc bias, lane-padded
    # out_ref: (TB, Np)
    x = x_ref[...]

    # Conv pre-activations for rows 2h and 2h+1 of every pooled position h, as two MXU
    # matmuls (the Conv2d padding (1,0) is already folded into We / Wo columns).
    z_even = jnp.dot(x, we_ref[...], preferred_element_type=jnp.float32)   # (TB, HCp)
    z_odd = jnp.dot(x, wo_ref[...], preferred_element_type=jnp.float32)    # (TB, HCp)

    # MaxPool2d((2,1)) -> +bias -> ReLU, all on one lane-dense tile.
    # (bias commutes with max; relu(max(a,b)) == max(relu(a),relu(b)).)
    pooled = jnp.maximum(jnp.maximum(z_even, z_odd) + cb_ref[...], 0.0)    # (TB, HCp)

    # Whole FC layer as a single MXU matmul with f32 accumulation.
    out_ref[...] = (
        jnp.dot(pooled, fw_ref[...], preferred_element_type=jnp.float32) + fb_ref[...]
    )


def _round_up(v, m):
    return ((v + m - 1) // m) * m


def pack_simple_cnn_params(conv_w, conv_b, fc_w, fc_b, input_size):
    """One-time host-side weight repack — keeps the per-forward path a single pallas_call.

    conv_w: (C, 1, 3, 1), conv_b: (C,), fc_w: (N, C*(input_size//2)), fc_b: (N,)
    """
    conv_w = np.asarray(conv_w, np.float32)
    conv_b = np.asarray(conv_b, np.float32)
    fc_w = np.asarray(fc_w, np.float32)
    fc_b = np.asarray(fc_b, np.float32)

    C = conv_w.shape[0]
    N, K = fc_w.shape
    H = int(input_size)
    H2 = H // 2                       # MaxPool2d((2,1)) floor semantics (odd H drops last row)
    assert K == C * H2, (K, C, H2)

    HCp = _round_up(H2 * C, 128)      # lane-pad the pooled / FC contraction axis
    Np = _round_up(N, 128)            # lane-pad the output so stores are unmasked

    cw = conv_w.reshape(C, 3)         # cw[c, k] = conv_w[c, 0, k, 0]

    # im2col fold: conv row r pre-activation = sum_k x[r - 1 + k] * w[k]  (padding (1,0)),
    # out-of-range rows contribute zero.  Pooled position h pools conv rows 2h and 2h+1.
    We = np.zeros((H, HCp), np.float32)
    Wo = np.zeros((H, HCp), np.float32)
    for h in range(H2):
        for k in range(3):
            re = 2 * h - 1 + k        # source x-row for conv row 2h, tap k
            if 0 <= re < H:
                We[re, h * C:(h + 1) * C] = cw[:, k]
            ro = 2 * h + k            # source x-row for conv row 2h+1, tap k
            if 0 <= ro < H:
                Wo[ro, h * C:(h + 1) * C] = cw[:, k]

    cbe = np.zeros((1, HCp), np.float32)
    cbe[0, :H2 * C] = np.tile(conv_b, H2)                 # column h*C + c -> conv_b[c]

    # PyTorch Flatten of (B, C, H2, 1) uses column c*H2 + h; the kernel packs pooled
    # columns as h*C + c, so permute to (H2, C, N) before flattening the rows.
    fwp = fc_w.reshape(N, C, H2).transpose(2, 1, 0).reshape(H2 * C, N)
    fw = np.zeros((HCp, Np), np.float32)
    fw[:H2 * C, :N] = fwp
    fb = np.zeros((1, Np), np.float32)
    fb[0, :N] = fc_b

    return (jnp.asarray(We), jnp.asarray(Wo), jnp.asarray(cbe),
            jnp.asarray(fw), jnp.asarray(fb), N)


def simple_cnn_forward(x, packed_params, *, tb=256):
    """x: (B, input_size) float32 (PyTorch forward views it as (B, 1, H, 1))."""
    We, Wo, cbe, fw, fb, num_classes = packed_params
    B, H = x.shape
    HCp = We.shape[1]
    Np = fw.shape[1]

    # Batch tile: multiple of 8 sublanes, no larger than the (padded) batch.
    tb = max(8, min(int(tb), _round_up(B, 8)))
    tb = (tb // 8) * 8
    bp = _round_up(B, tb)
    if bp != B:
        x = jnp.pad(x, ((0, bp - B), (0, 0)))

    out = pl.pallas_call(
        simple_cnn_kernel,
        out_shape=jax.ShapeDtypeStruct((bp, Np), jnp.float32),
        grid_spec=pltpu.PrefetchScalarGridSpec(
            num_scalar_prefetch=0,
            grid=(bp // tb,),
            in_specs=[
                pl.BlockSpec((tb, H), lambda i: (i, 0)),     # batch-tiled input
                pl.BlockSpec((H, HCp), lambda i: (0, 0)),    # weights: resident block
                pl.BlockSpec((H, HCp), lambda i: (0, 0)),
                pl.BlockSpec((1, HCp), lambda i: (0, 0)),
                pl.BlockSpec((HCp, Np), lambda i: (0, 0)),
                pl.BlockSpec((1, Np), lambda i: (0, 0)),
            ],
            out_specs=pl.BlockSpec((tb, Np), lambda i: (i, 0)),
        ),
        compiler_params=pltpu.CompilerParams(
            dimension_semantics=("parallel",),               # batch split across TCs on v7x
        ),
    )(x, We, Wo, cbe, fw, fb)
    return out[:B, :num_classes]


if __name__ == "__main__":
    B, input_size, num_classes = 64, 16, 8
    C = 32

    key = jax.random.PRNGKey(0)
    k1, k2, k3, k4, k5 = jax.random.split(key, 5)
    x = jax.random.normal(k1, (B, input_size), jnp.float32)
    conv_w = jax.random.normal(k2, (C, 1, 3, 1), jnp.float32) * 0.1
    conv_b = jax.random.normal(k3, (C,), jnp.float32) * 0.1
    fc_w = jax.random.normal(k4, (num_classes, C * (input_size // 2)), jnp.float32) * 0.1
    fc_b = jax.random.normal(k5, (num_classes,), jnp.float32) * 0.1

    packed = pack_simple_cnn_params(conv_w, conv_b, fc_w, fc_b, input_size)
    out = jax.block_until_ready(simple_cnn_forward(x, packed))

    # Pure-JAX reference mirroring the PyTorch NCHW forward exactly; HIGHEST precision so
    # the tolerance only has to absorb the kernel's MXU default-precision passes.
    hp = jax.lax.Precision.HIGHEST
    xin = x.reshape(B, 1, input_size, 1)
    ref = jax.lax.conv_general_dilated(
        xin, conv_w, window_strides=(1, 1), padding=((1, 1), (0, 0)),
        dimension_numbers=("NCHW", "OIHW", "NCHW"), precision=hp)
    ref = ref + conv_b.reshape(1, C, 1, 1)
    ref = jnp.maximum(ref, 0.0)
    ref = jnp.max(ref.reshape(B, C, input_size // 2, 2, 1), axis=3)   # MaxPool2d((2,1))
    ref = ref.reshape(B, C * (input_size // 2))                        # Flatten (C-major)
    ref = jnp.dot(ref, fc_w.T, precision=hp) + fc_b

    assert out.shape == (B, num_classes)
    max_err = float(jnp.max(jnp.abs(out - ref)))
    assert jnp.allclose(out, ref, atol=5e-3, rtol=5e-3), max_err
    print("KERNEL_OK")
</pallas_src>

<mosaic_0001>
module attributes {stable_mosaic.version = 11 : i64} {
  func.func @simple_cnn_kernel(%arg0: i32, %arg1: memref<64x16xf32, #tpu.memory_space<vmem>>, %arg2: memref<16x256xf32, #tpu.memory_space<vmem>>, %arg3: memref<16x256xf32, #tpu.memory_space<vmem>>, %arg4: memref<1x256xf32, #tpu.memory_space<vmem>>, %arg5: memref<256x128xf32, #tpu.memory_space<vmem>>, %arg6: memref<1x128xf32, #tpu.memory_space<vmem>>, %arg7: memref<64x128xf32, #tpu.memory_space<vmem>>) attributes {dimension_semantics = [#tpu.dimension_semantics<parallel>], iteration_bounds = array<i64: 1>, scalar_prefetch = 0 : i64, scratch_operands = 0 : i64, tpu.core_type = #tpu.core_type<tc>, window_params = [{transform_indices = @transform_0, window_bounds = array<i64: 64, 16>}, {pipeline_mode = #tpu.pipeline_mode<synchronous>, transform_indices = @transform_1, window_bounds = array<i64: 16, 256>}, {pipeline_mode = #tpu.pipeline_mode<synchronous>, transform_indices = @transform_2, window_bounds = array<i64: 16, 256>}, {pipeline_mode = #tpu.pipeline_mode<synchronous>, transform_indices = @transform_3, window_bounds = array<i64: 1, 256>}, {pipeline_mode = #tpu.pipeline_mode<synchronous>, transform_indices = @transform_4, window_bounds = array<i64: 256, 128>}, {pipeline_mode = #tpu.pipeline_mode<synchronous>, transform_indices = @transform_5, window_bounds = array<i64: 1, 128>}, {transform_indices = @transform_6, window_bounds = array<i64: 64, 128>}]} {
    %c0 = arith.constant 0 : index
    %c0_0 = arith.constant 0 : index
    %0 = vector.load %arg1[%c0, %c0_0] : memref<64x16xf32, #tpu.memory_space<vmem>>, vector<64x16xf32>
    %c0_1 = arith.constant 0 : index
    %c0_2 = arith.constant 0 : index
    %1 = vector.load %arg2[%c0_1, %c0_2] : memref<16x256xf32, #tpu.memory_space<vmem>>, vector<16x256xf32>
    %cst = arith.constant dense<0.000000e+00> : vector<64x256xf32>
    %2 = tpu.matmul %0, %1, %cst {dimension_numbers = #tpu.dot_dimension_numbers<[1], [0], [0], [1], [0, 0, 1, 1], [], []>} : vector<64x16xf32>, vector<16x256xf32>, vector<64x256xf32> -> vector<64x256xf32>
    %c0_3 = arith.constant 0 : index
    %c0_4 = arith.constant 0 : index
    %3 = vector.load %arg3[%c0_3, %c0_4] : memref<16x256xf32, #tpu.memory_space<vmem>>, vector<16x256xf32>
    %cst_5 = arith.constant dense<0.000000e+00> : vector<64x256xf32>
    %4 = tpu.matmul %0, %3, %cst_5 {dimension_numbers = #tpu.dot_dimension_numbers<[1], [0], [0], [1], [0, 0, 1, 1], [], []>} : vector<64x16xf32>, vector<16x256xf32>, vector<64x256xf32> -> vector<64x256xf32>
    %5 = arith.maximumf %2, %4 : vector<64x256xf32>
    %c0_6 = arith.constant 0 : index
    %c0_7 = arith.constant 0 : index
    %6 = vector.load %arg4[%c0_6, %c0_7] : memref<1x256xf32, #tpu.memory_space<vmem>>, vector<1x256xf32>
    %7 = vector.broadcast %6 : vector<1x256xf32> to vector<64x256xf32>
    %8 = arith.addf %5, %7 : vector<64x256xf32>
    %cst_8 = arith.constant 0.000000e+00 : f32
    %9 = vector.broadcast %cst_8 : f32 to vector<64x256xf32>
    %10 = arith.maximumf %8, %9 : vector<64x256xf32>
    %c0_9 = arith.constant 0 : index
    %c0_10 = arith.constant 0 : index
    %11 = vector.load %arg5[%c0_9, %c0_10] : memref<256x128xf32, #tpu.memory_space<vmem>>, vector<256x128xf32>
    %cst_11 = arith.constant dense<0.000000e+00> : vector<64x128xf32>
    %12 = tpu.matmul %10, %11, %cst_11 {dimension_numbers = #tpu.dot_dimension_numbers<[1], [0], [0], [1], [0, 0, 1, 1], [], []>} : vector<64x256xf32>, vector<256x128xf32>, vector<64x128xf32> -> vector<64x128xf32>
    %c0_12 = arith.constant 0 : index
    %c0_13 = arith.constant 0 : index
    %13 = vector.load %arg6[%c0_12, %c0_13] : memref<1x128xf32, #tpu.memory_space<vmem>>, vector<1x128xf32>
    %14 = vector.broadcast %13 : vector<1x128xf32> to vector<64x128xf32>
    %15 = arith.addf %12, %14 : vector<64x128xf32>
    %c0_14 = arith.constant 0 : index
    %c0_15 = arith.constant 0 : index
    %16 = vector.load %arg7[%c0_14, %c0_15] : memref<64x128xf32, #tpu.memory_space<vmem>>, vector<64x128xf32>
    tpu.vector_store %arg7[%c0_14, %c0_15], %15 {strides = array<i32>} : memref<64x128xf32, #tpu.memory_space<vmem>>, vector<64x128xf32>,
    return
  }
  func.func @transform_0(%arg0: i32) -> (i32, i32) {
    %c0_i32 = arith.constant 0 : i32
    %c0_i32_0 = arith.constant 0 : i32
    return %arg0, %c0_i32 : i32, i32
  }
  func.func @transform_1(%arg0: i32) -> (i32, i32) {
    %c0_i32 = arith.constant 0 : i32
    %c0_i32_0 = arith.constant 0 : i32
    %c0_i32_1 = arith.constant 0 : i32
    return %c0_i32, %c0_i32_0 : i32, i32
  }
  func.func @transform_2(%arg0: i32) -> (i32, i32) {
    %c0_i32 = arith.constant 0 : i32
    %c0_i32_0 = arith.constant 0 : i32
    %c0_i32_1 = arith.constant 0 : i32
    return %c0_i32, %c0_i32_0 : i32, i32
  }
  func.func @transform_3(%arg0: i32) -> (i32, i32) {
    %c0_i32 = arith.constant 0 : i32
    %c0_i32_0 = arith.constant 0 : i32
    %c0_i32_1 = arith.constant 0 : i32
    return %c0_i32, %c0_i32_0 : i32, i32
  }
  func.func @transform_4(%arg0: i32) -> (i32, i32) {
    %c0_i32 = arith.constant 0 : i32
    %c0_i32_0 = arith.constant 0 : i32
    %c0_i32_1 = arith.constant 0 : i32
    return %c0_i32, %c0_i32_0 : i32, i32
  }
  func.func @transform_5(%arg0: i32) -> (i32, i32) {
    %c0_i32 = arith.constant 0 : i32
    %c0_i32_0 = arith.constant 0 : i32
    %c0_i32_1 = arith.constant 0 : i32
    return %c0_i32, %c0_i32_0 : i32, i32
  }
  func.func @transform_6(%arg0: i32) -> (i32, i32) {
    %c0_i32 = arith.constant 0 : i32
    %c0_i32_0 = arith.constant 0 : i32
    return %arg0, %c0_i32 : i32, i32
  }
}

</mosaic_0001>

<llo_original>
// kernel: tpu_custom_call.1
$region0: #{tpu_custom_call.1}
  #allocation0 [shape = 'u32[]', space=smem, size = 0x4, offset = 0x4, fixed_abs, tag = 'smem constant byte address 0x4 - core index']
  #allocation1 [shape = 'u32[144,128]{1,0:T(1,128)}', space=vmem, size = 0x12000, scoped, tag = 'internal scratch']
  %s0 = inlined_call_operand.vmem [shape: f32[64,16], index: 0, kind: input, shape index: {}]
  %s1 = inlined_call_operand.vmem [shape: f32[16,256], index: 1, kind: input, shape index: {}]
  %s2 = inlined_call_operand.vmem [shape: f32[16,256], index: 2, kind: input, shape index: {}]
  %s3 = inlined_call_operand.vmem [shape: f32[1,256], index: 3, kind: input, shape index: {}]
  %s4 = inlined_call_operand.hbm [shape: f32[256,128], index: 4, kind: input, shape index: {}]
  %s5 = inlined_call_operand.vmem [shape: f32[1,128], index: 5, kind: input, shape index: {}]
  %s6 = inlined_call_operand.hbm [shape: f32[64,128], index: 6, kind: output, shape index: {}]
  %s7 = sld [smem:[#allocation0]]
  $region38: #{tpu_custom_call.1} parent=0
    _
  %s9 = ssub.s32 1, %s7
  %s10 = scalar_select 0, %s9, %s7
  $region1: #{tpu_custom_call.1} parent=0
    #allocation2 [shape = 'u8[131072]{0}', space=vmem, size = 0x20000, scoped, tag = 'input window, operand 4, single buffered']
    #allocation3 [shape = 's32[1]{0}', space=sflag, size = 0x4, scoped, tag = 'scoped memory for tpu_custom_call.1']
    #allocation4 [shape = 's32[1]{0}', space=sflag, size = 0x4, scoped, tag = 'scoped memory for tpu_custom_call.1']
    #allocation5 [shape = 'u8[32768]{0}', space=vmem, size = 0x8000, scoped, tag = 'output window, operand 0, single buffered']
    %11 = vsyncpa [#allocation3], 0
    %12 = vsyncpa [#allocation4], 0
    // Predicated region
    $region2: #{tpu_custom_call.1} parent=1 // pred_check
      _
    $region3: #{tpu_custom_call.1} parent=1 // pred_check_branch
      %14 = sbr.rel (0) target = $region5
    $region4: #{tpu_custom_call.1} parent=1 // pred_region
      _
    $region5: #{tpu_custom_call.1} parent=1 // pred_fallthru
      _
    // Predicated region
    $region6: #{tpu_custom_call.1} parent=1 // pred_check
      _
    $region7: #{tpu_custom_call.1} parent=1 // pred_check_branch
      %16 = sbr.rel (0) target = $region9
    $region8: #{tpu_custom_call.1} parent=1 // pred_region
      _
    $region9: #{tpu_custom_call.1} parent=1 // pred_fallthru
      _
    // Predicated region
    $region10: #{tpu_custom_call.1} parent=1 // pred_check
      _
    $region11: #{tpu_custom_call.1} parent=1 // pred_check_branch
      %18 = sbr.rel (0) target = $region13
    $region12: #{tpu_custom_call.1} parent=1 // pred_region
      _
    $region13: #{tpu_custom_call.1} parent=1 // pred_fallthru
      _
    // Predicated region
    $region14: #{tpu_custom_call.1} parent=1 // pred_check
      _
    $region15: #{tpu_custom_call.1} parent=1 // pred_check_branch
      %20 = sbr.rel (0) target = $region17
    $region16: #{tpu_custom_call.1} parent=1 // pred_region
      _
    $region17: #{tpu_custom_call.1} parent=1 // pred_fallthru
      _
    // Predicated region
    $region18: #{tpu_custom_call.1} parent=1 // pred_check
      _
    $region19: #{tpu_custom_call.1} parent=1 // pred_check_branch
      %22 = sbr.rel (0) target = $region21
    $region20: #{tpu_custom_call.1} parent=1 // pred_region
      %s24 = ssub.s32 4096, 4096
      %25 = vsyncadd [#allocation3], %s24
      %s26 = sshll.u32 [#allocation2], 4
      %s27 = int_to_ptr.vmem [resolvable:$true] %s26
      %32 = dma.hbm_to_vmem [thread:$0]  %s4, 4096, %s27, [#allocation3], 128, 128, 8
    $region21: #{tpu_custom_call.1} parent=1 // pred_fallthru
      _
    // Predicated region
    $region22: #{tpu_custom_call.1} parent=1 // pred_check
      _
    $region23: #{tpu_custom_call.1} parent=1 // pred_check_branch
      %34 = sbr.rel (0) target = $region25
    $region24: #{tpu_custom_call.1} parent=1 // pred_region
      _
    $region25: #{tpu_custom_call.1} parent=1 // pred_fallthru
      _
    // Predicated region
    $region26: #{tpu_custom_call.1} parent=1 // pred_check
      _
    $region27: #{tpu_custom_call.1} parent=1 // pred_check_branch
      %36 = sbr.rel (0) target = $region29
    $region28: #{tpu_custom_call.1} parent=1 // pred_region
      %37 = dma.done [#allocation3], 4096
    $region29: #{tpu_custom_call.1} parent=1 // pred_fallthru
      _
    %v38 = vld [vmem:[%s0] sm:$0xff]
    %v39 = vld [vmem:[%s0 + $0x8] sm:$0xff]
    %v40 = vld [vmem:[%s0 + $0x10] sm:$0xff]
    %v41 = vld [vmem:[%s0 + $0x18] sm:$0xff]
    %v42 = vld [vmem:[%s0 + $0x20] sm:$0xff]
    %v43 = vld [vmem:[%s0 + $0x28] sm:$0xff]
    %v44 = vld [vmem:[%s0 + $0x30] sm:$0xff]
    %v45 = vld [vmem:[%s0 + $0x38] sm:$0xff]
    %v46 = vld [vmem:[%s1] sm:$0xff]
    %v47 = vld [vmem:[%s1 + $0x8] sm:$0xff]
    %v48 = vld [vmem:[%s1 + $0x10] sm:$0xff]
    %v49 = vld [vmem:[%s1 + $0x18] sm:$0xff]
    %vm50 = vcmask 130048
    %v52 = vsel %vm50, %v38, 0
    %v55 = vsel %vm50, %v39, 0
    %v58 = vsel %vm50, %v40, 0
    %v61 = vsel %vm50, %v41, 0
    %v64 = vsel %vm50, %v42, 0
    %v67 = vsel %vm50, %v43, 0
    %v70 = vsel %vm50, %v44, 0
    %v73 = vsel %vm50, %v45, 0
    %75 = vmatprep.subr.mxu0 0.0
    %76 = vmatpush1.msra.mxu0 0.0
    %77 = vmatprep.subr.mxu0 0.0
    %78 = vmatpush1.msra.mxu0 0.0
    %79 = vmatprep.subr.mxu0 0.0
    %80 = vmatpush1.msra.mxu0 0.0
    %81 = vmatprep.subr.mxu0 0.0
    %82 = vmatpush1.msra.mxu0 0.0
    %83 = vmatprep.subr.mxu0 0.0
    %84 = vmatpush1.msra.mxu0 0.0
    %85 = vmatprep.subr.mxu0 0.0
    %86 = vmatpush1.msra.mxu0 0.0
    %87 = vmatprep.subr.mxu0 0.0
    %88 = vmatpush1.msra.mxu0 0.0
    %89 = vmatprep.subr.mxu0 0.0
    %90 = vmatpush1.msra.mxu0 0.0
    %91 = vmatprep.subr.mxu0 0.0
    %92 = vmatpush1.msra.mxu0 0.0
    %93 = vmatprep.subr.mxu0 0.0
    %94 = vmatpush1.msra.mxu0 0.0
    %95 = vmatprep.subr.mxu0 0.0
    %96 = vmatpush1.msra.mxu0 0.0
    %97 = vmatprep.subr.mxu0 0.0
    %98 = vmatpush1.msra.mxu0 0.0
    %99 = vmatprep.subr.mxu0 0.0
    %100 = vmatpush1.msra.mxu0 0.0
    %101 = vmatprep.subr.mxu0 0.0
    %102 = vmatpush1.msra.mxu0 0.0
    %103 = vmatprep.subr.mxu0 %v49
    %104 = vmatpush1.msra.mxu0 %v48
    %105 = vmatprep.subr.mxu0 %v47
    %106 = vmatpush1.msra.mxu0 %v46
    %107 = vmatprep.subr.mxu0 0.0
    %108 = vmatpush2.msra.mxu0 0.0
    %109 = vmatprep.subr.mxu0 0.0
    %110 = vmatpush2.msra.mxu0 0.0
    %111 = vmatprep.subr.mxu0 0.0
    %112 = vmatpush2.msra.mxu0 0.0
    %113 = vmatprep.subr.mxu0 0.0
    %114 = vmatpush2.msra.mxu0 0.0
    %115 = vmatprep.subr.mxu0 0.0
    %116 = vmatpush2.msra.mxu0 0.0
    %117 = vmatprep.subr.mxu0 0.0
    %118 = vmatpush2.msra.mxu0 0.0
    %119 = vmatprep.subr.mxu0 0.0
    %120 = vmatpush2.msra.mxu0 0.0
    %121 = vmatprep.subr.mxu0 0.0
    %122 = vmatpush2.msra.mxu0 0.0
    %123 = vmatprep.subr.mxu0 0.0
    %124 = vmatpush2.msra.mxu0 0.0
    %125 = vmatprep.subr.mxu0 0.0
    %126 = vmatpush2.msra.mxu0 0.0
    %127 = vmatprep.subr.mxu0 0.0
    %128 = vmatpush2.msra.mxu0 0.0
    %129 = vmatprep.subr.mxu0 0.0
    %130 = vmatpush2.msra.mxu0 0.0
    %131 = vmatprep.subr.mxu0 0.0
    %132 = vmatpush2.msra.mxu0 0.0
    %133 = vmatprep.subr.mxu0 0.0
    %134 = vmatpush2.msra.mxu0 0.0
    %135 = vmatprep.subr.mxu0 0.0
    %136 = vmatpush2.msra.mxu0 0.0
    %137 = vmatprep.subr.mxu0 0.0
    %138 = vmatpush2.msra.mxu0 0.0
    %139 = vmatprep.mubr.f32.mxu0 0.0
    %140 = vmatmul.mubr.f32.gmra.mxu0 %v52
    %v141 = vpop.f32.mrf.mxu0
    %v142 = vadd.f32 0.0, %v141
    %v143 = vpop.f32.mrf.mxu0
    %v144 = vadd.f32 0.0, %v143
    %145 = vmatprep.mubr.f32.mxu0 0.0
    %146 = vmatmul.mubr.f32.gmra.mxu0 %v55
    %v147 = vpop.f32.mrf.mxu0
    %v148 = vadd.f32 0.0, %v147
    %v149 = vpop.f32.mrf.mxu0
    %v150 = vadd.f32 0.0, %v149
    %151 = vmatprep.mubr.f32.mxu0 0.0
    %152 = vmatmul.mubr.f32.gmra.mxu0 %v58
    %v153 = vpop.f32.mrf.mxu0
    %v154 = vadd.f32 0.0, %v153
    %v155 = vpop.f32.mrf.mxu0
    %v156 = vadd.f32 0.0, %v155
    %157 = vmatprep.mubr.f32.mxu0 0.0
    %158 = vmatmul.mubr.f32.gmra.mxu0 %v61
    %v159 = vpop.f32.mrf.mxu0
    %v160 = vadd.f32 0.0, %v159
    %v161 = vpop.f32.mrf.mxu0
    %v162 = vadd.f32 0.0, %v161
    %163 = vmatprep.mubr.f32.mxu0 0.0
    %164 = vmatmul.mubr.f32.gmra.mxu0 %v64
    %v165 = vpop.f32.mrf.mxu0
    %v166 = vadd.f32 0.0, %v165
    %v167 = vpop.f32.mrf.mxu0
    %v168 = vadd.f32 0.0, %v167
    %169 = vmatprep.mubr.f32.mxu0 0.0
    %170 = vmatmul.mubr.f32.gmra.mxu0 %v67
    %v171 = vpop.f32.mrf.mxu0
    %v172 = vadd.f32 0.0, %v171
    %v173 = vpop.f32.mrf.mxu0
    %v174 = vadd.f32 0.0, %v173
    %175 = vmatprep.mubr.f32.mxu0 0.0
    %176 = vmatmul.mubr.f32.gmra.mxu0 %v70
    %v177 = vpop.f32.mrf.mxu0
    %v178 = vadd.f32 0.0, %v177
    %v179 = vpop.f32.mrf.mxu0
    %v180 = vadd.f32 0.0, %v179
    %181 = vmatprep.mubr.f32.mxu0 0.0
    %182 = vmatmul.mubr.f32.gmra.mxu0 %v73
    %v183 = vpop.f32.mrf.mxu0
    %v184 = vadd.f32 0.0, %v183
    %v185 = vpop.f32.mrf.mxu0
    %v186 = vadd.f32 0.0, %v185
    %187 = vdwg.mxu0
    %v188 = vld [vmem:[%s2] sm:$0xff]
    %v189 = vld [vmem:[%s2 + $0x8] sm:$0xff]
    %v190 = vld [vmem:[%s2 + $0x10] sm:$0xff]
    %v191 = vld [vmem:[%s2 + $0x18] sm:$0xff]
    %192 = vmatprep.subr.mxu0 0.0
    %193 = vmatpush1.msra.mxu0 0.0
    %194 = vmatprep.subr.mxu0 0.0
    %195 = vmatpush1.msra.mxu0 0.0
    %196 = vmatprep.subr.mxu0 0.0
    %197 = vmatpush1.msra.mxu0 0.0
    %198 = vmatprep.subr.mxu0 0.0
    %199 = vmatpush1.msra.mxu0 0.0
    %200 = vmatprep.subr.mxu0 0.0
    %201 = vmatpush1.msra.mxu0 0.0
    %202 = vmatprep.subr.mxu0 0.0
    %203 = vmatpush1.msra.mxu0 0.0
    %204 = vmatprep.subr.mxu0 0.0
    %205 = vmatpush1.msra.mxu0 0.0
    %206 = vmatprep.subr.mxu0 0.0
    %207 = vmatpush1.msra.mxu0 0.0
    %208 = vmatprep.subr.mxu0 0.0
    %209 = vmatpush1.msra.mxu0 0.0
    %210 = vmatprep.subr.mxu0 0.0
    %211 = vmatpush1.msra.mxu0 0.0
    %212 = vmatprep.subr.mxu0 0.0
    %213 = vmatpush1.msra.mxu0 0.0
    %214 = vmatprep.subr.mxu0 0.0
    %215 = vmatpush1.msra.mxu0 0.0
    %216 = vmatprep.subr.mxu0 0.0
    %217 = vmatpush1.msra.mxu0 0.0
    %218 = vmatprep.subr.mxu0 0.0
    %219 = vmatpush1.msra.mxu0 0.0
    %220 = vmatprep.subr.mxu0 %v191
    %221 = vmatpush1.msra.mxu0 %v190
    %222 = vmatprep.subr.mxu0 %v189
    %223 = vmatpush1.msra.mxu0 %v188
    %224 = vmatprep.subr.mxu0 0.0
    %225 = vmatpush2.msra.mxu0 0.0
    %226 = vmatprep.subr.mxu0 0.0
    %227 = vmatpush2.msra.mxu0 0.0
    %228 = vmatprep.subr.mxu0 0.0
    %229 = vmatpush2.msra.mxu0 0.0
    %230 = vmatprep.subr.mxu0 0.0
    %231 = vmatpush2.msra.mxu0 0.0
    %232 = vmatprep.subr.mxu0 0.0
    %233 = vmatpush2.msra.mxu0 0.0
    %234 = vmatprep.subr.mxu0 0.0
    %235 = vmatpush2.msra.mxu0 0.0
    %236 = vmatprep.subr.mxu0 0.0
    %237 = vmatpush2.msra.mxu0 0.0
    %238 = vmatprep.subr.mxu0 0.0
    %239 = vmatpush2.msra.mxu0 0.0
    %240 = vmatprep.subr.mxu0 0.0
    %241 = vmatpush2.msra.mxu0 0.0
    %242 = vmatprep.subr.mxu0 0.0
    %243 = vmatpush2.msra.mxu0 0.0
    %244 = vmatprep.subr.mxu0 0.0
    %245 = vmatpush2.msra.mxu0 0.0
    %246 = vmatprep.subr.mxu0 0.0
    %247 = vmatpush2.msra.mxu0 0.0
    %248 = vmatprep.subr.mxu0 0.0
    %249 = vmatpush2.msra.mxu0 0.0
    %250 = vmatprep.subr.mxu0 0.0
    %251 = vmatpush2.msra.mxu0 0.0
    %252 = vmatprep.subr.mxu0 0.0
    %253 = vmatpush2.msra.mxu0 0.0
    %254 = vmatprep.subr.mxu0 0.0
    %255 = vmatpush2.msra.mxu0 0.0
    %256 = vmatprep.mubr.f32.mxu0 0.0
    %257 = vmatmul.mubr.f32.gmra.mxu0 %v52
    %v258 = vpop.f32.mrf.mxu0
    %v259 = vadd.f32 0.0, %v258
    %v260 = vpop.f32.mrf.mxu0
    %v261 = vadd.f32 0.0, %v260
    %262 = vmatprep.mubr.f32.mxu0 0.0
    %263 = vmatmul.mubr.f32.gmra.mxu0 %v55
    %v264 = vpop.f32.mrf.mxu0
    %v265 = vadd.f32 0.0, %v264
    %v266 = vpop.f32.mrf.mxu0
    %v267 = vadd.f32 0.0, %v266
    %268 = vmatprep.mubr.f32.mxu0 0.0
    %269 = vmatmul.mubr.f32.gmra.mxu0 %v58
    %v270 = vpop.f32.mrf.mxu0
    %v271 = vadd.f32 0.0, %v270
    %v272 = vpop.f32.mrf.mxu0
    %v273 = vadd.f32 0.0, %v272
    %274 = vmatprep.mubr.f32.mxu0 0.0
    %275 = vmatmul.mubr.f32.gmra.mxu0 %v61
    %v276 = vpop.f32.mrf.mxu0
    %v277 = vadd.f32 0.0, %v276
    %v278 = vpop.f32.mrf.mxu0
    %v279 = vadd.f32 0.0, %v278
    %280 = vmatprep.mubr.f32.mxu0 0.0
    %281 = vmatmul.mubr.f32.gmra.mxu0 %v64
    %v282 = vpop.f32.mrf.mxu0
    %v283 = vadd.f32 0.0, %v282
    %v284 = vpop.f32.mrf.mxu0
    %v285 = vadd.f32 0.0, %v284
    %286 = vmatprep.mubr.f32.mxu0 0.0
    %287 = vmatmul.mubr.f32.gmra.mxu0 %v67
    %v288 = vpop.f32.mrf.mxu0
    %v289 = vadd.f32 0.0, %v288
    %v290 = vpop.f32.mrf.mxu0
    %v291 = vadd.f32 0.0, %v290
    %292 = vmatprep.mubr.f32.mxu0 0.0
    %293 = vmatmul.mubr.f32.gmra.mxu0 %v70
    %v294 = vpop.f32.mrf.mxu0
    %v295 = vadd.f32 0.0, %v294
    %v296 = vpop.f32.mrf.mxu0
    %v297 = vadd.f32 0.0, %v296
    %298 = vmatprep.mubr.f32.mxu0 0.0
    %299 = vmatmul.mubr.f32.gmra.mxu0 %v73
    %v300 = vpop.f32.mrf.mxu0
    %v301 = vadd.f32 0.0, %v300
    %v302 = vpop.f32.mrf.mxu0
    %v303 = vadd.f32 0.0, %v302
    %304 = vdwg.mxu0
    %v305 = vmax.f32 %v142, %v259
    %v306 = vmax.f32 %v144, %v261
    %v307 = vmax.f32 %v148, %v265
    %v308 = vmax.f32 %v150, %v267
    %v309 = vmax.f32 %v154, %v271
    %v310 = vmax.f32 %v156, %v273
    %v311 = vmax.f32 %v160, %v277
    %v312 = vmax.f32 %v162, %v279
    %v313 = vmax.f32 %v166, %v283
    %v314 = vmax.f32 %v168, %v285
    %v315 = vmax.f32 %v172, %v289
    %v316 = vmax.f32 %v174, %v291
    %v317 = vmax.f32 %v178, %v295
    %v318 = vmax.f32 %v180, %v297
    %v319 = vmax.f32 %v184, %v301
    %v320 = vmax.f32 %v186, %v303
    %v321 = vld [vmem:[%s3] sm:$0x3]
    %v323 = vlaneseq
    %v324 = vshrl.u32 %v323, 7
    %v325 = vsub.s32 0, %v324
    %v326 = vrot.slane %v321, %v325
    %v327 = vlaneseq
    %v328 = vshrl.u32 %v327, 7
    %v329 = vsub.s32 1, %v328
    %v330 = vrot.slane %v321, %v329
    %v333 = vadd.f32 %v305, %v326
    %v334 = vadd.f32 %v306, %v330
    %v335 = vadd.f32 %v307, %v326
    %v336 = vadd.f32 %v308, %v330
    %v337 = vadd.f32 %v309, %v326
    %v338 = vadd.f32 %v310, %v330
    %v339 = vadd.f32 %v311, %v326
    %v340 = vadd.f32 %v312, %v330
    %v341 = vadd.f32 %v313, %v326
    %v342 = vadd.f32 %v314, %v330
    %v343 = vadd.f32 %v315, %v326
    %v344 = vadd.f32 %v316, %v330
    %v345 = vadd.f32 %v317, %v326
    %v346 = vadd.f32 %v318, %v330
    %v347 = vadd.f32 %v319, %v326
    %v348 = vadd.f32 %v320, %v330
    %v349 = vmax.f32 %v333, 0.0
    %v350 = vmax.f32 %v334, 0.0
    %v351 = vmax.f32 %v335, 0.0
    %v352 = vmax.f32 %v336, 0.0
    %v353 = vmax.f32 %v337, 0.0
    %v354 = vmax.f32 %v338, 0.0
    %v355 = vmax.f32 %v339, 0.0
    %v356 = vmax.f32 %v340, 0.0
    %v357 = vmax.f32 %v341, 0.0
    %v358 = vmax.f32 %v342, 0.0
    %v359 = vmax.f32 %v343, 0.0
    %v360 = vmax.f32 %v344, 0.0
    %v361 = vmax.f32 %v345, 0.0
    %v362 = vmax.f32 %v346, 0.0
    %v363 = vmax.f32 %v347, 0.0
    %v364 = vmax.f32 %v348, 0.0
    %v365 = vld [vmem:[#allocation2] sm:$0xff]
    %v366 = vld [vmem:[#allocation2 + $0x8] sm:$0xff]
    %v367 = vld [vmem:[#allocation2 + $0x10] sm:$0xff]
    %v368 = vld [vmem:[#allocation2 + $0x18] sm:$0xff]
    %v369 = vld [vmem:[#allocation2 + $0x20] sm:$0xff]
    %v370 = vld [vmem:[#allocation2 + $0x28] sm:$0xff]
    %v371 = vld [vmem:[#allocation2 + $0x30] sm:$0xff]
    %v372 = vld [vmem:[#allocation2 + $0x38] sm:$0xff]
    %v373 = vld [vmem:[#allocation2 + $0x40] sm:$0xff]
    %v374 = vld [vmem:[#allocation2 + $0x48] sm:$0xff]
    %v375 = vld [vmem:[#allocation2 + $0x50] sm:$0xff]
    %v376 = vld [vmem:[#allocation2 + $0x58] sm:$0xff]
    %v377 = vld [vmem:[#allocation2 + $0x60] sm:$0xff]
    %v378 = vld [vmem:[#allocation2 + $0x68] sm:$0xff]
    %v379 = vld [vmem:[#allocation2 + $0x70] sm:$0xff]
    %v380 = vld [vmem:[#allocation2 + $0x78] sm:$0xff]
    %v381 = vld [vmem:[#allocation2 + $0x80] sm:$0xff]
    %v382 = vld [vmem:[#allocation2 + $0x88] sm:$0xff]
    %v383 = vld [vmem:[#allocation2 + $0x90] sm:$0xff]
    %v384 = vld [vmem:[#allocation2 + $0x98] sm:$0xff]
    %v385 = vld [vmem:[#allocation2 + $0xa0] sm:$0xff]
    %v386 = vld [vmem:[#allocation2 + $0xa8] sm:$0xff]
    %v387 = vld [vmem:[#allocation2 + $0xb0] sm:$0xff]
    %v388 = vld [vmem:[#allocation2 + $0xb8] sm:$0xff]
    %v389 = vld [vmem:[#allocation2 + $0xc0] sm:$0xff]
    %v390 = vld [vmem:[#allocation2 + $0xc8] sm:$0xff]
    %v391 = vld [vmem:[#allocation2 + $0xd0] sm:$0xff]
    %v392 = vld [vmem:[#allocation2 + $0xd8] sm:$0xff]
    %v393 = vld [vmem:[#allocation2 + $0xe0] sm:$0xff]
    %v394 = vld [vmem:[#allocation2 + $0xe8] sm:$0xff]
    %v395 = vld [vmem:[#allocation2 + $0xf0] sm:$0xff]
    %v396 = vld [vmem:[#allocation2 + $0xf8] sm:$0xff]
    %v397 = vld [vmem:[%s5] sm:$0x1]
    %v399 = vlaneseq
    %v400 = vshrl.u32 %v399, 7
    %v401 = vsub.s32 0, %v400
    %v402 = vrot.slane %v397, %v401
    %404 = vmatprep.subr.mxu0 0.0
    %405 = vmatpush1.msra.mxu0 %v380
    %406 = vmatprep.subr.mxu0 0.0
    %407 = vmatpush1.msra.mxu0 %v379
    %408 = vmatprep.subr.mxu0 0.0
    %409 = vmatpush1.msra.mxu0 %v378
    %410 = vmatprep.subr.mxu0 0.0
    %411 = vmatpush1.msra.mxu0 %v377
    %412 = vmatprep.subr.mxu0 0.0
    %413 = vmatpush1.msra.mxu0 %v376
    %414 = vmatprep.subr.mxu0 0.0
    %415 = vmatpush1.msra.mxu0 %v375
    %416 = vmatprep.subr.mxu0 0.0
    %417 = vmatpush1.msra.mxu0 %v374
    %418 = vmatprep.subr.mxu0 0.0
    %419 = vmatpush1.msra.mxu0 %v373
    %420 = vmatprep.subr.mxu0 0.0
    %421 = vmatpush1.msra.mxu0 %v372
    %422 = vmatprep.subr.mxu0 0.0
    %423 = vmatpush1.msra.mxu0 %v371
    %424 = vmatprep.subr.mxu0 0.0
    %425 = vmatpush1.msra.mxu0 %v370
    %426 = vmatprep.subr.mxu0 0.0
    %427 = vmatpush1.msra.mxu0 %v369
    %428 = vmatprep.subr.mxu0 0.0
    %429 = vmatpush1.msra.mxu0 %v368
    %430 = vmatprep.subr.mxu0 0.0
    %431 = vmatpush1.msra.mxu0 %v367
    %432 = vmatprep.subr.mxu0 0.0
    %433 = vmatpush1.msra.mxu0 %v366
    %434 = vmatprep.subr.mxu0 0.0
    %435 = vmatpush1.msra.mxu0 %v365
    %436 = vmatprep.subr.mxu0 0.0
    %437 = vmatpush2.msra.mxu0 %v396
    %438 = vmatprep.subr.mxu0 0.0
    %439 = vmatpush2.msra.mxu0 %v395
    %440 = vmatprep.subr.mxu0 0.0
    %441 = vmatpush2.msra.mxu0 %v394
    %442 = vmatprep.subr.mxu0 0.0
    %443 = vmatpush2.msra.mxu0 %v393
    %444 = vmatprep.subr.mxu0 0.0
    %445 = vmatpush2.msra.mxu0 %v392
    %446 = vmatprep.subr.mxu0 0.0
    %447 = vmatpush2.msra.mxu0 %v391
    %448 = vmatprep.subr.mxu0 0.0
    %449 = vmatpush2.msra.mxu0 %v390
    %450 = vmatprep.subr.mxu0 0.0
    %451 = vmatpush2.msra.mxu0 %v389
    %452 = vmatprep.subr.mxu0 0.0
    %453 = vmatpush2.msra.mxu0 %v388
    %454 = vmatprep.subr.mxu0 0.0
    %455 = vmatpush2.msra.mxu0 %v387
    %456 = vmatprep.subr.mxu0 0.0
    %457 = vmatpush2.msra.mxu0 %v386
    %458 = vmatprep.subr.mxu0 0.0
    %459 = vmatpush2.msra.mxu0 %v385
    %460 = vmatprep.subr.mxu0 0.0
    %461 = vmatpush2.msra.mxu0 %v384
    %462 = vmatprep.subr.mxu0 0.0
    %463 = vmatpush2.msra.mxu0 %v383
    %464 = vmatprep.subr.mxu0 0.0
    %465 = vmatpush2.msra.mxu0 %v382
    %466 = vmatprep.subr.mxu0 0.0
    %467 = vmatpush2.msra.mxu0 %v381
    %468 = vmatprep.mubr.f32.mxu0 %v350
    %469 = vmatmul.mubr.f32.gmra.mxu0 %v349
    %v470 = vpop.f32.mrf.mxu0
    %v471 = vadd.f32 %v402, %v470
    %v472 = vpop.f32.mrf.mxu0
    %473 = vmatprep.mubr.f32.mxu0 %v352
    %474 = vmatmul.mubr.f32.gmra.mxu0 %v351
    %v475 = vpop.f32.mrf.mxu0
    %v476 = vadd.f32 %v402, %v475
    %v477 = vpop.f32.mrf.mxu0
    %478 = vmatprep.mubr.f32.mxu0 %v354
    %479 = vmatmul.mubr.f32.gmra.mxu0 %v353
    %v480 = vpop.f32.mrf.mxu0
    %v481 = vadd.f32 %v402, %v480
    %v482 = vpop.f32.mrf.mxu0
    %483 = vmatprep.mubr.f32.mxu0 %v356
    %484 = vmatmul.mubr.f32.gmra.mxu0 %v355
    %v485 = vpop.f32.mrf.mxu0
    %v486 = vadd.f32 %v402, %v485
    %v487 = vpop.f32.mrf.mxu0
    %488 = vmatprep.mubr.f32.mxu0 %v358
    %489 = vmatmul.mubr.f32.gmra.mxu0 %v357
    %v490 = vpop.f32.mrf.mxu0
    %v491 = vadd.f32 %v402, %v490
    %v492 = vpop.f32.mrf.mxu0
    %493 = vmatprep.mubr.f32.mxu0 %v360
    %494 = vmatmul.mubr.f32.gmra.mxu0 %v359
    %v495 = vpop.f32.mrf.mxu0
    %v496 = vadd.f32 %v402, %v495
    %v497 = vpop.f32.mrf.mxu0
    %498 = vmatprep.mubr.f32.mxu0 %v362
    %499 = vmatmul.mubr.f32.gmra.mxu0 %v361
    %v500 = vpop.f32.mrf.mxu0
    %v501 = vadd.f32 %v402, %v500
    %v502 = vpop.f32.mrf.mxu0
    %503 = vmatprep.mubr.f32.mxu0 %v364
    %504 = vmatmul.mubr.f32.gmra.mxu0 %v363
    %v505 = vpop.f32.mrf.mxu0
    %v506 = vadd.f32 %v402, %v505
    %v507 = vpop.f32.mrf.mxu0
    %508 = vdwg.mxu0
    %509 = vst [vmem:[#allocation5] sm:$0xff] %v471
    %510 = vst [vmem:[#allocation5 + $0x8] sm:$0xff] %v476
    %511 = vst [vmem:[#allocation5 + $0x10] sm:$0xff] %v481
    %512 = vst [vmem:[#allocation5 + $0x18] sm:$0xff] %v486
    %513 = vst [vmem:[#allocation5 + $0x20] sm:$0xff] %v491
    %514 = vst [vmem:[#allocation5 + $0x28] sm:$0xff] %v496
    %515 = vst [vmem:[#allocation5 + $0x30] sm:$0xff] %v501
    %516 = vst [vmem:[#allocation5 + $0x38] sm:$0xff] %v506
    // Predicated region
    $region30: #{tpu_custom_call.1} parent=1 // pred_check
      _
    $region31: #{tpu_custom_call.1} parent=1 // pred_check_branch
      %518 = sbr.rel (0) target = $region33
    $region32: #{tpu_custom_call.1} parent=1 // pred_region
      %s520 = ssub.s32 1024, 1024
      %521 = vsyncadd [#allocation4], %s520
      %s522 = sshll.u32 [#allocation5], 4
      %s523 = int_to_ptr.vmem [resolvable:$true] %s522
      %528 = dma.vmem_to_hbm [thread:$0]  %s523, 1024, %s6, [#allocation4], 128, 128, 8
    $region33: #{tpu_custom_call.1} parent=1 // pred_fallthru
      _
    // Predicated region
    $region34: #{tpu_custom_call.1} parent=1 // pred_check
      _
    $region35: #{tpu_custom_call.1} parent=1 // pred_check_branch
      %530 = sbr.rel (0) target = $region37
    $region36: #{tpu_custom_call.1} parent=1 // pred_region
      %531 = dma.done [#allocation4], 1024
    $region37: #{tpu_custom_call.1} parent=1 // pred_fallthru
      _
    %532 = vsyncpa [#allocation3], 1
    %533 = vsyncpa [#allocation4], 1

</llo_original>
